<compile_context>
chip_gen: v6e
topology: v6e:2x2x1
jax: 0.10.0
libtpu: 0.0.40
codegen_flags: <defaults>
</compile_context>

<pallas_src>
import functools

import jax
import jax.numpy as jnp
from jax import lax
from jax.experimental import pallas as pl
from jax.experimental.pallas import tpu as pltpu


# ------------------------------- kernel body -------------------------------- #

def _stem_kernel(p_ref, w_ref, shift_ref, o_ref, *,
                 NB, R, K, Ho, Wo2, Hp, Wp, C_out):
    # One (batch-block, output-time) step: single fat-K matmul, then fused
    # BN-shift + ReLU + 3x3 / stride-2 spatial max pool, then store.
    M = NB * 2 * R
    p = p_ref[...].reshape(M, K)                       # (NB*2*R, K)
    y = jnp.dot(p, w_ref[...], preferred_element_type=jnp.float32)
    # eval-mode BN (scale already folded into weights) + ReLU
    y = jnp.maximum(y + shift_ref[...], 0.0)           # (M, C_out), >= 0

    G = NB * 2                                          # (batch-block, parity)
    y = y.reshape(G, Ho, Wo2, C_out)

    # --- H-direction pool: 3 taps, stride 2, pad 1 (zero pad valid post-ReLU).
    pad_end = 2 * Hp + 1 - Ho
    yp = jnp.concatenate(
        [jnp.zeros((G, 1, Wo2, C_out), jnp.float32), y,
         jnp.zeros((G, pad_end, Wo2, C_out), jnp.float32)], axis=1)
    a0 = yp[:, 0:2 * Hp].reshape(G, Hp, 2, Wo2, C_out)
    a1 = yp[:, 2:2 * Hp + 2].reshape(G, Hp, 2, Wo2, C_out)
    h = jnp.maximum(jnp.maximum(a0[:, :, 0], a0[:, :, 1]), a1[:, :, 0])
    h = h.reshape(NB, 2, Hp, Wo2, C_out)

    # --- W-direction pool: even col (2wp), odd col (2wp+1), odd col (2wp-1).
    ev = h[:, 0]                                        # (NB, Hp, Wp, C_out)
    od = h[:, 1]
    odm1 = jnp.concatenate(
        [jnp.zeros((NB, Hp, 1, C_out), jnp.float32), od[:, :, :Wp - 1, :]],
        axis=2)
    pooled = jnp.maximum(jnp.maximum(ev, od), odm1)     # (NB, Hp, Wp, C_out)
    o_ref[...] = pooled[None].astype(o_ref.dtype)


# --------------------------------- wrapper ----------------------------------- #

def resnet_basic_stem(x, weight, gamma, beta, running_mean, running_var,
                      *, stride, padding, eps=1e-5, n_block=1,
                      compute_dtype=None):
    """Fused Conv3d -> BN(eval) -> ReLU -> MaxPool3d([1,3,3],[1,2,2],[0,1,1]).

    x: (N, C_in, T, H, W); weight: (C_out, C_in, kt, kh, kw). Returns NCDHW.
    """
    N, C_in, T, H, W = x.shape
    C_out, _, kt, kh, kw = weight.shape
    st, sh, sw = stride
    pt, ph, pw = padding
    assert sh == 2 and sw == 2, "parity-split scheme assumes spatial stride 2"
    if compute_dtype is None:
        compute_dtype = x.dtype        # pass jnp.bfloat16 for the v6e/v7x fast path

    To = (T + 2 * pt - kt) // st + 1
    Ho = (H + 2 * ph - kh) // sh + 1
    Wo = (W + 2 * pw - kw) // sw + 1
    assert Wo % 2 == 0, "even conv output width required"
    Wo2 = Wo // 2
    # Fixed pool of the module: kernel [1,3,3], stride [1,2,2], padding [0,1,1].
    Hp = (Ho + 2 - 3) // 2 + 1
    Wp = (Wo + 2 - 3) // 2 + 1
    assert Wp == Wo2

    NB = n_block
    assert N % NB == 0
    R = Ho * Wo2                        # output rows per (batch, parity)
    K = kt * kh * kw * C_in             # full contraction in the minor dim
    M = NB * 2 * R

    # ---- wrapper glue (layout only, no math): parity-split im2col patches ----
    # patches[to, n, s, ho*Wo2 + wp, ((dt*kh+dh)*kw+dw)*C_in + ci]
    #   = x_pad[n, ci, to*st + dt, 2*ho + dh, 4*wp + 2*s + dw]
    xpad = jnp.pad(x, ((0, 0), (0, 0), (pt, pt), (ph, ph), (pw, pw)))
    parts = []
    for s in (0, 1):
        cols = []
        for dt in range(kt):
            for dh in range(kh):
                for dw in range(kw):
                    sl = lax.slice(
                        xpad,
                        (0, 0, dt, dh, 2 * s + dw),
                        (N, C_in,
                         dt + st * (To - 1) + 1,
                         dh + 2 * (Ho - 1) + 1,
                         2 * s + dw + 4 * (Wo2 - 1) + 1),
                        (1, 1, st, 2, 4))               # (N, C_in, To, Ho, Wo2)
                    cols.append(sl)
        p = jnp.stack(cols, axis=-1)                    # (N, C_in, To, Ho, Wo2, kthw)
        p = p.transpose(2, 0, 3, 4, 5, 1)               # (To, N, Ho, Wo2, kthw, C_in)
        parts.append(p.reshape(To, N, R, K))
    patches = jnp.stack(parts, axis=2).astype(compute_dtype)   # (To, N, 2, R, K)

    # ---- fold BN scale into conv weights; shift-only epilogue (eval-mode BN) --
    scale = (gamma / jnp.sqrt(running_var + eps)).astype(jnp.float32)
    shift = (beta - running_mean * scale).reshape(1, C_out).astype(jnp.float32)
    wm = weight.astype(jnp.float32) * scale[:, None, None, None, None]
    wm = wm.transpose(2, 3, 4, 1, 0).reshape(K, C_out).astype(compute_dtype)

    # ---- VMEM hint / cost estimate (matters only for realistic shapes) -------
    rup = lambda a, m: -(-a // m) * m
    isz = jnp.dtype(compute_dtype).itemsize
    osz = jnp.dtype(x.dtype).itemsize
    in_blk = NB * 2 * rup(R, 8) * rup(K, 128) * isz
    out_blk = NB * Hp * rup(Wp, 8) * rup(C_out, 128) * osz
    w_blk = rup(K, 8) * rup(C_out, 128) * isz
    tmp = 6 * M * rup(C_out, 128) * 4                   # epilogue temporaries
    est = 2 * in_blk + 2 * out_blk + w_blk + tmp
    vmem_limit = None if est <= (16 << 20) else int(min(est, 100 << 20))

    kernel = functools.partial(_stem_kernel, NB=NB, R=R, K=K, Ho=Ho, Wo2=Wo2,
                               Hp=Hp, Wp=Wp, C_out=C_out)

    out = pl.pallas_call(
        kernel,
        out_shape=jax.ShapeDtypeStruct((To, N, Hp, Wp, C_out), x.dtype),
        grid_spec=pltpu.PrefetchScalarGridSpec(
            num_scalar_prefetch=0,
            grid=(N // NB, To),
            in_specs=[
                pl.BlockSpec((1, NB, 2, R, K), lambda nb, to: (to, nb, 0, 0, 0)),
                pl.BlockSpec((K, C_out), lambda nb, to: (0, 0)),     # resident
                pl.BlockSpec((1, C_out), lambda nb, to: (0, 0)),     # resident
            ],
            out_specs=pl.BlockSpec((1, NB, Hp, Wp, C_out),
                                   lambda nb, to: (to, nb, 0, 0, 0)),
        ),
        compiler_params=pltpu.CompilerParams(
            dimension_semantics=("parallel", "parallel"),
            vmem_limit_bytes=vmem_limit),
        cost_estimate=pl.CostEstimate(
            flops=2 * N * To * 2 * R * K * C_out,
            transcendentals=0,
            bytes_accessed=int(To * N * 2 * R * K * isz + K * C_out * isz
                               + C_out * 4 + To * N * Hp * Wp * C_out * osz)),
    )(patches, wm, shift)

    # back to PyTorch NCDHW
    return out.transpose(1, 4, 0, 2, 3)


# ---------------------------- pure-JAX reference ----------------------------- #

def _reference(x, weight, gamma, beta, mean, var, stride, padding, eps):
    dn = lax.conv_dimension_numbers(x.shape, weight.shape,
                                    ('NCDHW', 'OIDHW', 'NCDHW'))
    y = lax.conv_general_dilated(x, weight, window_strides=stride,
                                 padding=[(p, p) for p in padding],
                                 dimension_numbers=dn)
    s = gamma / jnp.sqrt(var + eps)
    y = y * s[None, :, None, None, None] \
        + (beta - mean * s)[None, :, None, None, None]
    y = jnp.maximum(y, 0.0)
    y = lax.reduce_window(y, -jnp.inf, lax.max,
                          window_dimensions=(1, 1, 1, 3, 3),
                          window_strides=(1, 1, 1, 2, 2),
                          padding=[(0, 0), (0, 0), (0, 0), (1, 1), (1, 1)])
    return y


# ---------------------------------- main ------------------------------------- #

if __name__ == "__main__":
    # Small shapes consistent with the module: dim_in=3 (rgb), dim_out=8,
    # kernel=[3,3,3], stride=[1,2,2], padding=[1,1,1].
    N, C_in, T, H, W = 2, 3, 4, 16, 16
    C_out = 8
    kernel_size = (3, 3, 3)
    stride = (1, 2, 2)
    padding = (1, 1, 1)
    eps = 1e-5

    key = jax.random.PRNGKey(0)
    kx, kw_, kg, kb, km, kv = jax.random.split(key, 6)
    x = jax.random.normal(kx, (N, C_in, T, H, W), dtype=jnp.float32)
    weight = 0.1 * jax.random.normal(kw_, (C_out, C_in) + kernel_size,
                                     dtype=jnp.float32)
    gamma = 1.0 + 0.1 * jax.random.normal(kg, (C_out,), dtype=jnp.float32)
    beta = 0.1 * jax.random.normal(kb, (C_out,), dtype=jnp.float32)
    running_mean = 0.05 * jax.random.normal(km, (C_out,), dtype=jnp.float32)
    running_var = 1.0 + 0.1 * jax.random.uniform(kv, (C_out,), dtype=jnp.float32)

    out = resnet_basic_stem(x, weight, gamma, beta, running_mean, running_var,
                            stride=stride, padding=padding, eps=eps)
    out = jax.block_until_ready(out)

    ref = _reference(x, weight, gamma, beta, running_mean, running_var,
                     stride, padding, eps)
    assert out.shape == ref.shape, (out.shape, ref.shape)
    err = float(jnp.max(jnp.abs(out - ref)))
    assert jnp.allclose(out, ref, atol=1e-4, rtol=1e-4), err

    print("KERNEL_OK")
</pallas_src>

<mosaic_0001>
module attributes {stable_mosaic.version = 11 : i64} {
  func.func @_stem_kernel(%arg0: i32, %arg1: i32, %arg2: memref<1x1x2x32x81xf32, #tpu.memory_space<vmem>>, %arg3: memref<81x8xf32, #tpu.memory_space<vmem>>, %arg4: memref<1x8xf32, #tpu.memory_space<vmem>>, %arg5: memref<1x1x4x4x8xf32, #tpu.memory_space<vmem>>) attributes {dimension_semantics = [#tpu.dimension_semantics<parallel>, #tpu.dimension_semantics<parallel>], iteration_bounds = array<i64: 2, 4>, scalar_prefetch = 0 : i64, scratch_operands = 0 : i64, tpu.core_type = #tpu.core_type<tc>, window_params = [{transform_indices = @transform_0, window_bounds = array<i64: 1, 1, 2, 32, 81>}, {pipeline_mode = #tpu.pipeline_mode<synchronous>, transform_indices = @transform_1, window_bounds = array<i64: 81, 8>}, {pipeline_mode = #tpu.pipeline_mode<synchronous>, transform_indices = @transform_2, window_bounds = array<i64: 1, 8>}, {transform_indices = @transform_3, window_bounds = array<i64: 1, 1, 4, 4, 8>}]} {
    %c0 = arith.constant 0 : index
    %c0_0 = arith.constant 0 : index
    %c0_1 = arith.constant 0 : index
    %c0_2 = arith.constant 0 : index
    %c0_3 = arith.constant 0 : index
    %0 = vector.load %arg2[%c0, %c0_0, %c0_1, %c0_2, %c0_3] : memref<1x1x2x32x81xf32, #tpu.memory_space<vmem>>, vector<1x1x2x32x81xf32>
    %1 = vector.shape_cast %0 : vector<1x1x2x32x81xf32> to vector<64x81xf32>
    %c0_4 = arith.constant 0 : index
    %c0_5 = arith.constant 0 : index
    %2 = vector.load %arg3[%c0_4, %c0_5] : memref<81x8xf32, #tpu.memory_space<vmem>>, vector<81x8xf32>
    %cst = arith.constant dense<0.000000e+00> : vector<64x8xf32>
    %3 = tpu.matmul %1, %2, %cst {dimension_numbers = #tpu.dot_dimension_numbers<[1], [0], [0], [1], [0, 0, 1, 1], [], []>} : vector<64x81xf32>, vector<81x8xf32>, vector<64x8xf32> -> vector<64x8xf32>
    %c0_6 = arith.constant 0 : index
    %c0_7 = arith.constant 0 : index
    %4 = vector.load %arg4[%c0_6, %c0_7] : memref<1x8xf32, #tpu.memory_space<vmem>>, vector<1x8xf32>
    %5 = vector.broadcast %4 : vector<1x8xf32> to vector<64x8xf32>
    %6 = arith.addf %3, %5 : vector<64x8xf32>
    %cst_8 = arith.constant 0.000000e+00 : f32
    %7 = vector.broadcast %cst_8 : f32 to vector<64x8xf32>
    %8 = arith.maximumf %6, %7 : vector<64x8xf32>
    %9 = vector.shape_cast %8 : vector<64x8xf32> to vector<2x8x4x8xf32>
    %cst_9 = arith.constant 0.000000e+00 : f32
    %10 = vector.broadcast %cst_9 : f32 to vector<2x1x4x8xf32>
    %cst_10 = arith.constant 0.000000e+00 : f32
    %11 = vector.broadcast %cst_10 : f32 to vector<2x1x4x8xf32>
    %12 = tpu.concatenate %10, %9, %11 in 1 : vector<2x1x4x8xf32>, vector<2x8x4x8xf32>, vector<2x1x4x8xf32> -> vector<2x10x4x8xf32>
    %13 = vector.extract_strided_slice %12 {offsets = [0, 0, 0, 0], sizes = [2, 8, 4, 8], strides = [1, 1, 1, 1]} : vector<2x10x4x8xf32> to vector<2x8x4x8xf32>
    %14 = vector.shape_cast %13 : vector<2x8x4x8xf32> to vector<2x4x2x4x8xf32>
    %15 = vector.extract_strided_slice %12 {offsets = [0, 2, 0, 0], sizes = [2, 8, 4, 8], strides = [1, 1, 1, 1]} : vector<2x10x4x8xf32> to vector<2x8x4x8xf32>
    %16 = vector.shape_cast %15 : vector<2x8x4x8xf32> to vector<2x4x2x4x8xf32>
    %17 = vector.extract_strided_slice %14 {offsets = [0, 0, 0, 0, 0], sizes = [2, 4, 1, 4, 8], strides = [1, 1, 1, 1, 1]} : vector<2x4x2x4x8xf32> to vector<2x4x1x4x8xf32>
    %18 = vector.shape_cast %17 : vector<2x4x1x4x8xf32> to vector<2x4x4x8xf32>
    %19 = vector.extract_strided_slice %14 {offsets = [0, 0, 1, 0, 0], sizes = [2, 4, 1, 4, 8], strides = [1, 1, 1, 1, 1]} : vector<2x4x2x4x8xf32> to vector<2x4x1x4x8xf32>
    %20 = vector.shape_cast %19 : vector<2x4x1x4x8xf32> to vector<2x4x4x8xf32>
    %21 = arith.maximumf %18, %20 : vector<2x4x4x8xf32>
    %22 = vector.extract_strided_slice %16 {offsets = [0, 0, 0, 0, 0], sizes = [2, 4, 1, 4, 8], strides = [1, 1, 1, 1, 1]} : vector<2x4x2x4x8xf32> to vector<2x4x1x4x8xf32>
    %23 = vector.shape_cast %22 : vector<2x4x1x4x8xf32> to vector<2x4x4x8xf32>
    %24 = arith.maximumf %21, %23 : vector<2x4x4x8xf32>
    %25 = vector.shape_cast %24 : vector<2x4x4x8xf32> to vector<1x2x4x4x8xf32>
    %26 = vector.extract_strided_slice %25 {offsets = [0, 0, 0, 0, 0], sizes = [1, 1, 4, 4, 8], strides = [1, 1, 1, 1, 1]} : vector<1x2x4x4x8xf32> to vector<1x1x4x4x8xf32>
    %27 = vector.shape_cast %26 : vector<1x1x4x4x8xf32> to vector<1x4x4x8xf32>
    %28 = vector.extract_strided_slice %25 {offsets = [0, 1, 0, 0, 0], sizes = [1, 1, 4, 4, 8], strides = [1, 1, 1, 1, 1]} : vector<1x2x4x4x8xf32> to vector<1x1x4x4x8xf32>
    %29 = vector.shape_cast %28 : vector<1x1x4x4x8xf32> to vector<1x4x4x8xf32>
    %cst_11 = arith.constant 0.000000e+00 : f32
    %30 = vector.broadcast %cst_11 : f32 to vector<1x4x1x8xf32>
    %31 = vector.extract_strided_slice %29 {offsets = [0, 0, 0, 0], sizes = [1, 4, 3, 8], strides = [1, 1, 1, 1]} : vector<1x4x4x8xf32> to vector<1x4x3x8xf32>
    %32 = tpu.concatenate %30, %31 in 2 : vector<1x4x1x8xf32>, vector<1x4x3x8xf32> -> vector<1x4x4x8xf32>
    %33 = arith.maximumf %27, %29 : vector<1x4x4x8xf32>
    %34 = arith.maximumf %33, %32 : vector<1x4x4x8xf32>
    %35 = vector.shape_cast %34 : vector<1x4x4x8xf32> to vector<1x1x4x4x8xf32>
    %c0_12 = arith.constant 0 : index
    %c0_13 = arith.constant 0 : index
    %c0_14 = arith.constant 0 : index
    %c0_15 = arith.constant 0 : index
    %c0_16 = arith.constant 0 : index
    %36 = vector.load %arg5[%c0_12, %c0_13, %c0_14, %c0_15, %c0_16] : memref<1x1x4x4x8xf32, #tpu.memory_space<vmem>>, vector<1x1x4x4x8xf32>
    tpu.vector_store %arg5[%c0_12, %c0_13, %c0_14, %c0_15, %c0_16], %35 {strides = array<i32>} : memref<1x1x4x4x8xf32, #tpu.memory_space<vmem>>, vector<1x1x4x4x8xf32>,
    return
  }
  func.func @transform_0(%arg0: i32, %arg1: i32) -> (i32, i32, i32, i32, i32) {
    %c0_i32 = arith.constant 0 : i32
    %c0_i32_0 = arith.constant 0 : i32
    %c0_i32_1 = arith.constant 0 : i32
    %c0_i32_2 = arith.constant 0 : i32
    return %arg1, %arg0, %c0_i32, %c0_i32_0, %c0_i32_1 : i32, i32, i32, i32, i32
  }
  func.func @transform_1(%arg0: i32, %arg1: i32) -> (i32, i32) {
    %c0_i32 = arith.constant 0 : i32
    %c0_i32_0 = arith.constant 0 : i32
    %c0_i32_1 = arith.constant 0 : i32
    return %c0_i32, %c0_i32_0 : i32, i32
  }
  func.func @transform_2(%arg0: i32, %arg1: i32) -> (i32, i32) {
    %c0_i32 = arith.constant 0 : i32
    %c0_i32_0 = arith.constant 0 : i32
    %c0_i32_1 = arith.constant 0 : i32
    return %c0_i32, %c0_i32_0 : i32, i32
  }
  func.func @transform_3(%arg0: i32, %arg1: i32) -> (i32, i32, i32, i32, i32) {
    %c0_i32 = arith.constant 0 : i32
    %c0_i32_0 = arith.constant 0 : i32
    %c0_i32_1 = arith.constant 0 : i32
    %c0_i32_2 = arith.constant 0 : i32
    return %arg1, %arg0, %c0_i32, %c0_i32_0, %c0_i32_1 : i32, i32, i32, i32, i32
  }
}

</mosaic_0001>

<llo_original>
// kernel: tpu_custom_call.1
$region0: #{tpu_custom_call.1}
  #allocation0 [shape = 'u32[]', space=smem, size = 0x4, offset = 0x4, fixed_abs, tag = 'smem constant byte address 0x4 - core index']
  #allocation1 [shape = 'u32[144,128]{1,0:T(1,128)}', space=vmem, size = 0x12000, scoped, tag = 'internal scratch']
  %s0 = inlined_call_operand.hbm [shape: f32[4,2,2,32,81], index: 0, kind: input, shape index: {}]
  %s1 = inlined_call_operand.vmem [shape: f32[81,8], index: 1, kind: input, shape index: {}]
  %s2 = inlined_call_operand.vmem [shape: f32[1,8], index: 2, kind: input, shape index: {}]
  %s3 = inlined_call_operand.hbm [shape: f32[4,2,4,4,8], index: 3, kind: output, shape index: {}]
  %s4 = sld [smem:[#allocation0]]
  $region49: #{tpu_custom_call.1} parent=0
    _
  %s6 = ssub.s32 1, %s4
  %s7 = scalar_select 0, %s6, %s4
  $region1: #{tpu_custom_call.1} parent=0
    #allocation2 [shape = 'u8[65536]{0}', space=vmem, size = 0x10000, scoped, tag = 'input window, operand 0']
    #allocation3 [shape = 's32[2]{0}', space=sflag, size = 0x8, scoped, tag = 'scoped memory for tpu_custom_call.1']
    #allocation4 [shape = 's32[2]{0}', space=sflag, size = 0x8, scoped, tag = 'scoped memory for tpu_custom_call.1']
    #allocation5 [shape = 'u8[16384]{0}', space=vmem, size = 0x4000, scoped, tag = 'output window, operand 0']
    %8 = vsyncpa [#allocation3], 0
    %s9 = scalar_lea.sflag [#allocation3], 1
    %10 = vsyncpa %s9, 0
    %11 = vsyncpa [#allocation4], 0
    %s12 = scalar_lea.sflag [#allocation4], 1
    %13 = vsyncpa %s12, 0
    loop: start=0, step=1, limit=10
    $region2: #{tpu_custom_call.1} parent=1 // loop_pre_header
      _
    $region3: #{tpu_custom_call.1} parent=1 // loop_header
      %s15 = sphi 0, %s19
      %p16 = scmp.ge.s32.totalorder %s15, 10
      %s22 = sphi 0, %s34
      %s23 = sphi 0, %s30
      %s24 = sphi 0, %s22
      %s25 = sphi 0, %s23
      %s26 = sphi 0, %s24
      %s27 = sphi 0, %s25
      %s39 = sphi 0, %s41
      %s42 = sphi 0, %s39
      %s43 = sphi 0, %s42
      %s59 = sphi 0, %s43
      %s63 = sphi 0, %s63
      %s65 = sphi 0, %s63
      %s66 = sphi 0, %s65
      %s80 = sphi 0, %s66
      %s84 = sphi 0, %s84
      %s86 = sphi 0, %s84
      %s87 = sphi 0, %s86
      %s101 = sphi 0, %s87
      %s109 = sphi 0, %s111
      %s112 = sphi 0, %s109
      %s113 = sphi 0, %s112
      %s129 = sphi 0, %s113
    $region4: #{tpu_custom_call.1} parent=1 // loop_header_branch
      %18 = sbr.rel (%p16) target = $region8
    $region5: #{tpu_custom_call.1} parent=1 // loop_body
      %s20 = ssub.s32 %s15, 1
      %s21 = ssub.s32 %s15, 2
      %s28 = sadd.s32 1, %s23
      %p29 = scmp.ge.s32.totalorder %s28, 4
      %s30 = scalar_select %p29, 0, %s28
      %s31 = sadd.s32 1, %s22
      %s32 = scalar_select %p29, %s31, %s22
      %p33 = scmp.ge.s32.totalorder %s32, 2
      %s34 = scalar_select %p33, 0, %s32
      %s35 = ssub.s32 %s23, %s30
      %s36 = ssub.s32 %s22, %s34
      %s37 = sor.u32 %s35, %s36
      %p38 = scmp.eq.s32.totalorder %s37, 0
      %s40 = sadd.s32 %s39, 1
      %s41 = scalar_select %p38, %s39, %s40
      %p44 = pneg %p38
      %p45 = scmp.eq.s32.totalorder %s15, 7
      %p46 = por %p44, %p45
      %p47 = scmp.ne.s32.totalorder %s39, %s42
      %p48 = scmp.eq.s32.totalorder %s15, 0
      %p49 = por %p47, %p48
      %p50 = scmp.ne.s32.totalorder %s39, %s42
      %p51 = scmp.eq.s32.totalorder %s20, 7
      %p52 = por %p50, %p51
      %p53 = scmp.ne.s32.totalorder %s42, %s43
      %p54 = scmp.eq.s32.totalorder %s20, 0
      %p55 = por %p53, %p54
      %p56 = scmp.ne.s32.totalorder %s42, %s43
      %p57 = scmp.eq.s32.totalorder %s21, 7
      %p58 = por %p56, %p57
      %p60 = scmp.ne.s32.totalorder %s43, %s59
      %p61 = scmp.eq.s32.totalorder %s21, 0
      %p62 = por %p60, %p61
      %s64 = sadd.s32 %s63, 1
      %p67 = scmp.eq.s32.totalorder %s15, 7
      %p68 = scmp.ne.s32.totalorder %s63, %s65
      %p69 = scmp.eq.s32.totalorder %s15, 0
      %p70 = por %p68, %p69
      %p71 = scmp.ne.s32.totalorder %s63, %s65
      %p72 = scmp.eq.s32.totalorder %s20, 7
      %p73 = por %p71, %p72
      %p74 = scmp.ne.s32.totalorder %s65, %s66
      %p75 = scmp.eq.s32.totalorder %s20, 0
      %p76 = por %p74, %p75
      %p77 = scmp.ne.s32.totalorder %s65, %s66
      %p78 = scmp.eq.s32.totalorder %s21, 7
      %p79 = por %p77, %p78
      %p81 = scmp.ne.s32.totalorder %s66, %s80
      %p82 = scmp.eq.s32.totalorder %s21, 0
      %p83 = por %p81, %p82
      %s85 = sadd.s32 %s84, 1
      %p88 = scmp.eq.s32.totalorder %s15, 7
      %p89 = scmp.ne.s32.totalorder %s84, %s86
      %p90 = scmp.eq.s32.totalorder %s15, 0
      %p91 = por %p89, %p90
      %p92 = scmp.ne.s32.totalorder %s84, %s86
      %p93 = scmp.eq.s32.totalorder %s20, 7
      %p94 = por %p92, %p93
      %p95 = scmp.ne.s32.totalorder %s86, %s87
      %p96 = scmp.eq.s32.totalorder %s20, 0
      %p97 = por %p95, %p96
      %p98 = scmp.ne.s32.totalorder %s86, %s87
      %p99 = scmp.eq.s32.totalorder %s21, 7
      %p100 = por %p98, %p99
      %p102 = scmp.ne.s32.totalorder %s87, %s101
      %p103 = scmp.eq.s32.totalorder %s21, 0
      %p104 = por %p102, %p103
      %s105 = ssub.s32 %s23, %s30
      %s106 = ssub.s32 %s22, %s34
      %s107 = sor.u32 %s105, %s106
      %p108 = scmp.eq.s32.totalorder %s107, 0
      %s110 = sadd.s32 %s109, 1
      %s111 = scalar_select %p108, %s109, %s110
      %p114 = pneg %p108
      %p115 = scmp.eq.s32.totalorder %s15, 7
      %p116 = por %p114, %p115
      %p117 = scmp.ne.s32.totalorder %s109, %s112
      %p118 = scmp.eq.s32.totalorder %s15, 0
      %p119 = por %p117, %p118
      %p120 = scmp.ne.s32.totalorder %s109, %s112
      %p121 = scmp.eq.s32.totalorder %s20, 7
      %p122 = por %p120, %p121
      %p123 = scmp.ne.s32.totalorder %s112, %s113
      %p124 = scmp.eq.s32.totalorder %s20, 0
      %p125 = por %p123, %p124
      %p126 = scmp.ne.s32.totalorder %s112, %s113
      %p127 = scmp.eq.s32.totalorder %s21, 7
      %p128 = por %p126, %p127
      %p130 = scmp.ne.s32.totalorder %s113, %s129
      %p131 = scmp.eq.s32.totalorder %s21, 0
      %p132 = por %p130, %p131
      %p133 = scmp.le.s32.totalorder 1, %s15
      %p134 = scmp.lt.s32.totalorder %s15, 9
      %p135 = pnand %p133, %p134
      %p136 = pneg %p135
      // Predicated region
      $region9: #{tpu_custom_call.1} parent=5 // pred_check
        _
      $region10: #{tpu_custom_call.1} parent=5 // pred_check_branch
        %138 = sbr.rel (%p135) target = $region12
      $region11: #{tpu_custom_call.1} parent=5 // pred_region
        %s139 = ssub.s32 %s15, 1
        // Predicated region
        $region13: #{tpu_custom_call.1} parent=11 // pred_check
          %p140 = pneg %p76
        $region14: #{tpu_custom_call.1} parent=11 // pred_check_branch
          %142 = sbr.rel (%p140) target = $region16
        $region15: #{tpu_custom_call.1} parent=11 // pred_region
          _
        $region16: #{tpu_custom_call.1} parent=11 // pred_fallthru
          _
        // Predicated region
        $region17: #{tpu_custom_call.1} parent=11 // pred_check
          %p143 = pneg %p97
        $region18: #{tpu_custom_call.1} parent=11 // pred_check_branch
          %145 = sbr.rel (%p143) target = $region20
        $region19: #{tpu_custom_call.1} parent=11 // pred_region
          _
        $region20: #{tpu_custom_call.1} parent=11 // pred_fallthru
          _
      $region12: #{tpu_custom_call.1} parent=5 // pred_fallthru
        _
      %p146 = scmp.lt.s32.totalorder %s15, 8
      // Predicated region
      $region21: #{tpu_custom_call.1} parent=5 // pred_check
        %p147 = pneg %p146
      $region22: #{tpu_custom_call.1} parent=5 // pred_check_branch
        %149 = sbr.rel (%p147) target = $region24
      $region23: #{tpu_custom_call.1} parent=5 // pred_region
        // Predicated region
        $region25: #{tpu_custom_call.1} parent=23 // pred_check
          %p150 = pneg %p49
        $region26: #{tpu_custom_call.1} parent=23 // pred_check_branch
          %152 = sbr.rel (%p150) target = $region28
        $region27: #{tpu_custom_call.1} parent=23 // pred_region
          %s153 = sand.u32 %s39, 1
          %s154 = scalar_lea.sflag [#allocation3], %s153
          %s155 = sand.u32 %s39, 1
          %s156 = smul.addr %s155, 64
          %s157 = scalar_lea.vmem [#allocation2], %s156
          %s159 = ssub.s32 1024, 1024
          %160 = vsyncadd %s154, %s159
          %s161 = smul.addr %s22, 8
          %s162 = smul.addr %s23, 16
          %s163 = sadd.s32 %s161, %s162
          %s164 = smul.addr %s163, 128
          %s165 = scalar_lea.hbm %s0, %s164
          %s166 = sshll.u32 %s157, 4
          %s167 = int_to_ptr.vmem [resolvable:$true] %s166
          %172 = dma.hbm_to_vmem [thread:$0]  %s165, 1024, %s167, %s154, 128, 128, 8
        $region28: #{tpu_custom_call.1} parent=23 // pred_fallthru
          _
      $region24: #{tpu_custom_call.1} parent=5 // pred_fallthru
        _
      %p173 = scmp.le.s32.totalorder 1, %s15
      %p174 = scmp.lt.s32.totalorder %s15, 9
      %p175 = pnand %p173, %p174
      %p176 = pneg %p175
      // Predicated region
      $region29: #{tpu_custom_call.1} parent=5 // pred_check
        _
      $region30: #{tpu_custom_call.1} parent=5 // pred_check_branch
        %178 = sbr.rel (%p175) target = $region32
      $region31: #{tpu_custom_call.1} parent=5 // pred_region
        %s179 = ssub.s32 %s15, 1
        %s180 = sand.u32 %s42, 1
        %s181 = scalar_lea.sflag [#allocation3], %s180
        %s182 = sand.u32 %s42, 1
        %s183 = smul.addr %s182, 64
        %s184 = scalar_lea.vmem [#allocation2], %s183
        // Predicated region
        $region33: #{tpu_custom_call.1} parent=31 // pred_check
          %p185 = pneg %p55
        $region34: #{tpu_custom_call.1} parent=31 // pred_check_branch
          %187 = sbr.rel (%p185) target = $region36
        $region35: #{tpu_custom_call.1} parent=31 // pred_region
          %188 = dma.done %s181, 1024
        $region36: #{tpu_custom_call.1} parent=31 // pred_fallthru
          _
        %s189 = sand.u32 %s42, 1
        %s190 = scalar_lea.sflag [#allocation3], %s189
        %s191 = sand.u32 %s42, 1
        %s192 = smul.addr %s191, 64
        %s193 = scalar_lea.vmem [#allocation2], %s192
        %p194 = pneg %p55
        %p195 = pneg %p52
        %p196 = pneg %p76
        %p197 = pneg %p73
        %p198 = pneg %p97
        %p199 = pneg %p94
        %p200 = pneg %p125
        %p201 = pneg %p122
        %s202 = sand.u32 %s112, 1
        %s203 = scalar_lea.sflag [#allocation4], %s202
        %s204 = sand.u32 %s112, 1
        %s205 = smul.addr %s204, 16
        %s206 = scalar_lea.vmem [#allocation5], %s205
        %v207 = vld [vmem:[%s184] sm:$0xff]
        %v208 = vld [vmem:[%s184 + $0x8] sm:$0xff]
        %v209 = vld [vmem:[%s184 + $0x10] sm:$0xff]
        %v210 = vld [vmem:[%s184 + $0x18] sm:$0xff]
        %v211 = vld [vmem:[%s184 + $0x20] sm:$0xff]
        %v212 = vld [vmem:[%s184 + $0x28] sm:$0xff]
        %v213 = vld [vmem:[%s184 + $0x30] sm:$0xff]
        %v214 = vld [vmem:[%s184 + $0x38] sm:$0xff]
        %v215 = vld [vmem:[%s1] sm:$0xff]
        %v216 = vld [vmem:[%s1 + $0x8] sm:$0xff]
        %v217 = vld [vmem:[%s1 + $0x10] sm:$0xff]
        %v218 = vld [vmem:[%s1 + $0x18] sm:$0xff]
        %v219 = vld [vmem:[%s1 + $0x20] sm:$0xff]
        %v220 = vld [vmem:[%s1 + $0x28] sm:$0xff]
        %v221 = vld [vmem:[%s1 + $0x30] sm:$0xff]
        %v222 = vld [vmem:[%s1 + $0x38] sm:$0xff]
        %v223 = vld [vmem:[%s1 + $0x40] sm:$0xff]
        %v224 = vld [vmem:[%s1 + $0x48] sm:$0xff]
        %v225 = vld [vmem:[%s1 + $0x50] sm:$0x1]
        %v226 = vld [vmem:[%s2] sm:$0x1]
        %v228 = vlaneseq
        %v229 = vshrl.u32 %v228, 7
        %v230 = vsub.s32 0, %v229
        %v231 = vrot.slane %v226, %v230
        %vm233 = vcmask 662528
        %v235 = vsel %vm233, %v207, 0
        %v238 = vsel %vm233, %v208, 0
        %v241 = vsel %vm233, %v209, 0
        %v244 = vsel %vm233, %v210, 0
        %v247 = vsel %vm233, %v211, 0
        %v250 = vsel %vm233, %v212, 0
        %v253 = vsel %vm233, %v213, 0
        %v256 = vsel %vm233, %v214, 0
        %vm258 = vcmask 1040384
        %v260 = vsel %vm258, %v225, 0
        %262 = vmatprep.subr.mxu0 0.0
        %263 = vmatpush1.msra.mxu0 0.0
        %264 = vmatprep.subr.mxu0 0.0
        %265 = vmatpush1.msra.mxu0 0.0
        %266 = vmatprep.subr.mxu0 0.0
        %267 = vmatpush1.msra.mxu0 0.0
        %268 = vmatprep.subr.mxu0 0.0
        %269 = vmatpush1.msra.mxu0 0.0
        %270 = vmatprep.subr.mxu0 0.0
        %271 = vmatpush1.msra.mxu0 0.0
        %272 = vmatprep.subr.mxu0 0.0
        %273 = vmatpush1.msra.mxu0 %v260
        %274 = vmatprep.subr.mxu0 0.0
        %275 = vmatpush1.msra.mxu0 %v224
        %276 = vmatprep.subr.mxu0 0.0
        %277 = vmatpush1.msra.mxu0 %v223
        %278 = vmatprep.subr.mxu0 0.0
        %279 = vmatpush1.msra.mxu0 %v222
        %280 = vmatprep.subr.mxu0 0.0
        %281 = vmatpush1.msra.mxu0 %v221
        %282 = vmatprep.subr.mxu0 0.0
        %283 = vmatpush1.msra.mxu0 %v220
        %284 = vmatprep.subr.mxu0 0.0
        %285 = vmatpush1.msra.mxu0 %v219
        %286 = vmatprep.subr.mxu0 0.0
        %287 = vmatpush1.msra.mxu0 %v218
        %288 = vmatprep.subr.mxu0 0.0
        %289 = vmatpush1.msra.mxu0 %v217
        %290 = vmatprep.subr.mxu0 0.0
        %291 = vmatpush1.msra.mxu0 %v216
        %292 = vmatprep.subr.mxu0 0.0
        %293 = vmatpush1.msra.mxu0 %v215
        %294 = vmatprep.subr.mxu0 0.0
        %295 = vmatpush2.msra.mxu0 0.0
        %296 = vmatprep.subr.mxu0 0.0
        %297 = vmatpush2.msra.mxu0 0.0
        %298 = vmatprep.subr.mxu0 0.0
        %299 = vmatpush2.msra.mxu0 0.0
        %300 = vmatprep.subr.mxu0 0.0
        %301 = vmatpush2.msra.mxu0 0.0
        %302 = vmatprep.subr.mxu0 0.0
        %303 = vmatpush2.msra.mxu0 0.0
        %304 = vmatprep.subr.mxu0 0.0
        %305 = vmatpush2.msra.mxu0 0.0
        %306 = vmatprep.subr.mxu0 0.0
        %307 = vmatpush2.msra.mxu0 0.0
        %308 = vmatprep.subr.mxu0 0.0
        %309 = vmatpush2.msra.mxu0 0.0
        %310 = vmatprep.subr.mxu0 0.0
        %311 = vmatpush2.msra.mxu0 0.0
        %312 = vmatprep.subr.mxu0 0.0
        %313 = vmatpush2.msra.mxu0 0.0
        %314 = vmatprep.subr.mxu0 0.0
        %315 = vmatpush2.msra.mxu0 0.0
        %316 = vmatprep.subr.mxu0 0.0
        %317 = vmatpush2.msra.mxu0 0.0
        %318 = vmatprep.subr.mxu0 0.0
        %319 = vmatpush2.msra.mxu0 0.0
        %320 = vmatprep.subr.mxu0 0.0
        %321 = vmatpush2.msra.mxu0 0.0
        %322 = vmatprep.subr.mxu0 0.0
        %323 = vmatpush2.msra.mxu0 0.0
        %324 = vmatprep.subr.mxu0 0.0
        %325 = vmatpush2.msra.mxu0 0.0
        %326 = vmatprep.mubr.f32.mxu0 0.0
        %327 = vmatmul.mubr.f32.gmra.mxu0 %v235
        %v328 = vpop.f32.mrf.mxu0
        %v329 = vadd.f32 %v231, %v328
        %v330 = vpop.f32.mrf.mxu0
        %331 = vmatprep.mubr.f32.mxu0 0.0
        %332 = vmatmul.mubr.f32.gmra.mxu0 %v238
        %v333 = vpop.f32.mrf.mxu0
        %v334 = vadd.f32 %v231, %v333
        %v335 = vpop.f32.mrf.mxu0
        %336 = vmatprep.mubr.f32.mxu0 0.0
        %337 = vmatmul.mubr.f32.gmra.mxu0 %v241
        %v338 = vpop.f32.mrf.mxu0
        %v339 = vadd.f32 %v231, %v338
        %v340 = vpop.f32.mrf.mxu0
        %341 = vmatprep.mubr.f32.mxu0 0.0
        %342 = vmatmul.mubr.f32.gmra.mxu0 %v244
        %v343 = vpop.f32.mrf.mxu0
        %v344 = vadd.f32 %v231, %v343
        %v345 = vpop.f32.mrf.mxu0
        %346 = vmatprep.mubr.f32.mxu0 0.0
        %347 = vmatmul.mubr.f32.gmra.mxu0 %v247
        %v348 = vpop.f32.mrf.mxu0
        %v349 = vadd.f32 %v231, %v348
        %v350 = vpop.f32.mrf.mxu0
        %351 = vmatprep.mubr.f32.mxu0 0.0
        %352 = vmatmul.mubr.f32.gmra.mxu0 %v250
        %v353 = vpop.f32.mrf.mxu0
        %v354 = vadd.f32 %v231, %v353
        %v355 = vpop.f32.mrf.mxu0
        %356 = vmatprep.mubr.f32.mxu0 0.0
        %357 = vmatmul.mubr.f32.gmra.mxu0 %v253
        %v358 = vpop.f32.mrf.mxu0
        %v359 = vadd.f32 %v231, %v358
        %v360 = vpop.f32.mrf.mxu0
        %361 = vmatprep.mubr.f32.mxu0 0.0
        %362 = vmatmul.mubr.f32.gmra.mxu0 %v256
        %v363 = vpop.f32.mrf.mxu0
        %v364 = vadd.f32 %v231, %v363
        %v365 = vpop.f32.mrf.mxu0
        %366 = vdwg.mxu0
        %v367 = vmax.f32 %v329, 0.0
        %v368 = vmax.f32 %v334, 0.0
        %v369 = vmax.f32 %v339, 0.0
        %v370 = vmax.f32 %v344, 0.0
        %v371 = vmax.f32 %v349, 0.0
        %v372 = vmax.f32 %v354, 0.0
        %v373 = vmax.f32 %v359, 0.0
        %v374 = vmax.f32 %v364, 0.0
        %v383 = vcombine.high %v367, %v367
        %v384 = vcombine.high %v368, %v368
        %v385 = vcombine.high %v369, %v369
        %v386 = vcombine.high %v370, %v370
        %v387 = vcombine.high %v371, %v371
        %v388 = vcombine.high %v372, %v372
        %v389 = vcombine.high %v373, %v373
        %v390 = vcombine.high %v374, %v374
        %v399 = vmax.f32 %v367, 0.0
        %v400 = vmax.f32 %v383, %v368
        %v401 = vmax.f32 %v384, %v369
        %v402 = vmax.f32 %v385, %v370
        %v403 = vmax.f32 %v371, 0.0
        %v404 = vmax.f32 %v387, %v372
        %v405 = vmax.f32 %v388, %v373
        %v406 = vmax.f32 %v389, %v374
        %v407 = vmax.f32 %v399, %v383
        %v408 = vmax.f32 %v400, %v384
        %v409 = vmax.f32 %v401, %v385
        %v410 = vmax.f32 %v402, %v386
        %v411 = vmax.f32 %v403, %v387
        %v412 = vmax.f32 %v404, %v388
        %v413 = vmax.f32 %v405, %v389
        %v414 = vmax.f32 %v406, %v390
        %v419 = vrot.slane %v411, 7
        %v420 = vrot.slane %v412, 7
        %v421 = vrot.slane %v413, 7
        %v422 = vrot.slane %v414, 7
        %v427 = vsel %vm258, 0.0, %v419
        %v428 = vsel %vm258, 0.0, %v420
        %v429 = vsel %vm258, 0.0, %v421
        %v430 = vsel %vm258, 0.0, %v422
        %v431 = vmax.f32 %v407, %v411
        %v432 = vmax.f32 %v408, %v412
        %v433 = vmax.f32 %v409, %v413
        %v434 = vmax.f32 %v410, %v414
        %v435 = vmax.f32 %v431, %v427
        %v436 = vmax.f32 %v432, %v428
        %v437 = vmax.f32 %v433, %v429
        %v438 = vmax.f32 %v434, %v430
        %vm439 = vcmask 60416
        %440 = vst.msk [vmem:[%s206] sm:$0xf] %vm439, %v435
        %441 = vst.msk [vmem:[%s206 + $0x4] sm:$0xf] %vm439, %v436
        %442 = vst.msk [vmem:[%s206 + $0x8] sm:$0xf] %vm439, %v437
        %443 = vst.msk [vmem:[%s206 + $0xc] sm:$0xf] %vm439, %v438
        %s444 = sand.u32 %s112, 1
        %s445 = scalar_lea.sflag [#allocation4], %s444
        %s446 = sand.u32 %s112, 1
        %s447 = smul.addr %s446, 16
        %s448 = scalar_lea.vmem [#allocation5], %s447
        // Predicated region
        $region37: #{tpu_custom_call.1} parent=31 // pred_check
          %p449 = pneg %p122
        $region38: #{tpu_custom_call.1} parent=31 // pred_check_branch
          %451 = sbr.rel (%p449) target = $region40
        $region39: #{tpu_custom_call.1} parent=31 // pred_region
          %s453 = ssub.s32 256, 256
          %454 = vsyncadd %s445, %s453
          %s455 = smul.addr %s24, 4
          %s456 = smul.addr %s25, 8
          %s457 = sadd.s32 %s455, %s456
          %s458 = smul.addr %s457, 64
          %s459 = scalar_lea.hbm %s3, %s458
          %s460 = sshll.u32 %s448, 4
          %s461 = int_to_ptr.vmem [resolvable:$true] %s460
          %466 = dma.vmem_to_hbm [thread:$0]  %s461, 256, %s459, %s445, 64, 64, 4
        $region40: #{tpu_custom_call.1} parent=31 // pred_fallthru
          _
      $region32: #{tpu_custom_call.1} parent=5 // pred_fallthru
        _
      %p467 = scmp.le.s32.totalorder 2, %s15
      // Predicated region
      $region41: #{tpu_custom_call.1} parent=5 // pred_check
        %p468 = pneg %p467
      $region42: #{tpu_custom_call.1} parent=5 // pred_check_branch
        %470 = sbr.rel (%p468) target = $region44
      $region43: #{tpu_custom_call.1} parent=5 // pred_region
        %s471 = ssub.s32 %s15, 2
        // Predicated region
        $region45: #{tpu_custom_call.1} parent=43 // pred_check
          %p472 = pneg %p128
        $region46: #{tpu_custom_call.1} parent=43 // pred_check_branch
          %474 = sbr.rel (%p472) target = $region48
        $region47: #{tpu_custom_call.1} parent=43 // pred_region
          %s475 = sand.u32 %s113, 1
          %s476 = scalar_lea.sflag [#allocation4], %s475
          %s477 = sand.u32 %s113, 1
          %s478 = smul.addr %s477, 16
          %s479 = scalar_lea.vmem [#allocation5], %s478
          %480 = dma.done %s476, 256
        $region48: #{tpu_custom_call.1} parent=43 // pred_fallthru
          _
      $region44: #{tpu_custom_call.1} parent=5 // pred_fallthru
        _
    $region6: #{tpu_custom_call.1} parent=1 // loop_footer
      %s19 = sadd.s32 1, %s15
    $region7: #{tpu_custom_call.1} parent=1 // loop_footer_branch
      %14 = sbr.rel target = $region3
    $region8: #{tpu_custom_call.1} parent=1 // loop_exit
      _
    %481 = vsyncpa [#allocation3], 1
    %s482 = scalar_lea.sflag [#allocation3], 1
    %483 = vsyncpa %s482, 1
    %484 = vsyncpa [#allocation4], 1
    %s485 = scalar_lea.sflag [#allocation4], 1
    %486 = vsyncpa %s485, 1

</llo_original>
